<compile_context>
chip_gen: v7x
topology: tpu7x:2x2x1
jax: 0.10.0
libtpu: 0.0.40
codegen_flags: <defaults>
</compile_context>

<pallas_src>
import jax
import jax.numpy as jnp
import numpy as np
from jax.experimental import pallas as pl
from jax.experimental.pallas import tpu as pltpu


# pywt reconstruction filters (rec_lo, rec_hi); mode='zero' only (as the module specifies).
_WAVE_FILTERS = {
    "haar": (
        (0.7071067811865476, 0.7071067811865476),
        (0.7071067811865476, -0.7071067811865476),
    ),
    "db2": (
        (0.48296291314453414, 0.8365163037378077,
         0.22414386804201339, -0.12940952255126037),
        (-0.12940952255126037, -0.22414386804201339,
         0.8365163037378077, -0.48296291314453414),
    ),
    "db4": (
        (0.23037781330885523, 0.7148465705525415, 0.6308807679295904,
         -0.02798376941698385, -0.18703481171888114, 0.030841381835986965,
         0.032883011666982945, -0.010597401784997278),
        (-0.010597401784997278, -0.032883011666982945, 0.030841381835986965,
         0.18703481171888114, -0.02798376941698385, -0.6308807679295904,
         0.7148465705525415, -0.23037781330885523),
    ),
}
_PYWT_FAMILY = "db2"   # stand-in for params.pywt_family


def _make_sfb1d_kernel(g0, g1, l_half):
    """One inverse-DWT level (both output phases) in polyphase form."""
    lf = len(g0)

    def kernel(lo_ref, hi_ref, even_ref, odd_ref):
        even = None
        odd = None
        for d in range(lf // 2):
            lo_d = lo_ref[:, pl.ds(d, l_half)].astype(jnp.float32)   # (TR, Lhalf)
            hi_d = hi_ref[:, pl.ds(d, l_half)].astype(jnp.float32)
            ke, ko = lf - 2 - 2 * d, lf - 1 - 2 * d
            e = g0[ke] * lo_d + g1[ke] * hi_d
            o = g0[ko] * lo_d + g1[ko] * hi_d
            even = e if even is None else even + e
            odd = o if odd is None else odd + o
        even_ref[...] = even.astype(even_ref.dtype)
        odd_ref[...] = odd.astype(odd_ref.dtype)

    return kernel


def _pick_row_tile(r, l, itemsize):
    """Largest power-of-two row tile that divides r and fits a VMEM buffer budget."""
    budget = 4 * 1024 * 1024   # bytes per pipelined input buffer (double-buffered)
    for t in (512, 256, 128, 64, 32, 16, 8):
        if r % t == 0 and t * l * itemsize <= budget:
            return t
    return r                    # fall back to a single full-extent block


def _sfb1d(lo, hi, g0, g1):
    """One synthesis level: (N, C, L) x 2 -> (N, C, 2L + 2 - Lf)."""
    n, c, l = lo.shape
    assert hi.shape == lo.shape, (lo.shape, hi.shape)
    lf = len(g0)
    assert lf % 2 == 0, "pywt orthogonal wavelets have even filter length"
    l_half = l + 1 - lf // 2

    # Flatten (N, C) -> rows: free reshape, better sublane packing, single grid axis.
    r = n * c
    lo2 = lo.reshape(r, l)
    hi2 = hi.reshape(r, l)
    tr = _pick_row_tile(r, l, lo.dtype.itemsize)

    kernel = _make_sfb1d_kernel(tuple(map(float, g0)), tuple(map(float, g1)), l_half)
    even, odd = pl.pallas_call(
        kernel,
        out_shape=(jax.ShapeDtypeStruct((r, l_half), lo.dtype),
                   jax.ShapeDtypeStruct((r, l_half), lo.dtype)),
        grid=(r // tr,),
        in_specs=[pl.BlockSpec((tr, l), lambda i: (i, 0)),
                  pl.BlockSpec((tr, l), lambda i: (i, 0))],
        out_specs=(pl.BlockSpec((tr, l_half), lambda i: (i, 0)),
                   pl.BlockSpec((tr, l_half), lambda i: (i, 0))),
        compiler_params=pltpu.CompilerParams(
            dimension_semantics=("parallel",)),
    )(lo2, hi2)

    # Lane interleave (out[..., 2m] = even[m], out[..., 2m+1] = odd[m]) done in XLA.
    return jnp.stack([even, odd], axis=-1).reshape(n, c, 2 * l_half)


def idwt_forward(low, highs, wave=_PYWT_FAMILY):
    """Mirror of IDWT.forward == DWT1DInverse(wave, mode='zero')((low, highs))."""
    g0, g1 = _WAVE_FILTERS[wave]
    ll = low
    for h in highs[::-1]:                      # coarsest level first
        if ll.shape[-1] > h.shape[-1]:         # 'unpad' the extra sample (pytorch_wavelets)
            ll = ll[..., :-1]
        ll = _sfb1d(ll, h, g0, g1)
    return ll


# ----------------------------- plain reference ------------------------------------
def _ref_sfb1d_np(lo, hi, g0, g1):
    """Direct scatter definition of the grouped conv_transpose1d pair (mode='zero')."""
    lo = np.asarray(lo, np.float64)
    hi = np.asarray(hi, np.float64)
    n, c, l = lo.shape
    lf = len(g0)
    pad = lf - 2
    l_out = 2 * l + 2 - lf
    out = np.zeros((n, c, l_out), np.float64)
    for i in range(l):
        for k in range(lf):
            t = 2 * i + k - pad
            if 0 <= t < l_out:
                out[:, :, t] += lo[:, :, i] * g0[k] + hi[:, :, i] * g1[k]
    return out


def idwt_ref(low, highs, wave=_PYWT_FAMILY):
    g0, g1 = _WAVE_FILTERS[wave]
    ll = np.asarray(low)
    for h in highs[::-1]:
        if ll.shape[-1] > h.shape[-1]:
            ll = ll[..., :-1]
        ll = _ref_sfb1d_np(ll, np.asarray(h), g0, g1)
    return ll


if __name__ == "__main__":
    key = jax.random.PRNGKey(0)
    k1, k2, k3 = jax.random.split(key, 3)
    N, C = 2, 4

    # 2-level db2 coefficient pyramid (zero padding), coarsest length 16.
    low = jax.random.normal(k1, (N, C, 16), dtype=jnp.float32)
    highs = [jax.random.normal(k2, (N, C, 29), dtype=jnp.float32),   # finest level
             jax.random.normal(k3, (N, C, 16), dtype=jnp.float32)]   # coarsest level

    out = jax.block_until_ready(idwt_forward(low, highs))
    ref = idwt_ref(low, highs)

    assert out.shape == ref.shape, (out.shape, ref.shape)
    np.testing.assert_allclose(np.asarray(out), ref, rtol=1e-5, atol=1e-5)
    print("KERNEL_OK")
</pallas_src>

<mosaic_0001>
module attributes {stable_mosaic.version = 11 : i64} {
  func.func @kernel(%arg0: i32, %arg1: memref<8x16xf32, #tpu.memory_space<vmem>>, %arg2: memref<8x16xf32, #tpu.memory_space<vmem>>, %arg3: memref<8x15xf32, #tpu.memory_space<vmem>>, %arg4: memref<8x15xf32, #tpu.memory_space<vmem>>) attributes {dimension_semantics = [#tpu.dimension_semantics<parallel>], iteration_bounds = array<i64: 1>, scalar_prefetch = 0 : i64, scratch_operands = 0 : i64, tpu.core_type = #tpu.core_type<tc>, window_params = [{transform_indices = @transform_0, window_bounds = array<i64: 8, 16>}, {transform_indices = @transform_1, window_bounds = array<i64: 8, 16>}, {transform_indices = @transform_2, window_bounds = array<i64: 8, 15>}, {transform_indices = @transform_3, window_bounds = array<i64: 8, 15>}]} {
    %c0 = arith.constant 0 : index
    %c0_0 = arith.constant 0 : index
    %0 = vector.load %arg1[%c0, %c0_0] : memref<8x16xf32, #tpu.memory_space<vmem>>, vector<8x15xf32>
    %c0_1 = arith.constant 0 : index
    %c0_2 = arith.constant 0 : index
    %1 = vector.load %arg2[%c0_1, %c0_2] : memref<8x16xf32, #tpu.memory_space<vmem>>, vector<8x15xf32>
    %cst = arith.constant 0.224143863 : f32
    %2 = vector.broadcast %cst : f32 to vector<8x15xf32>
    %3 = arith.mulf %2, %0 : vector<8x15xf32>
    %cst_3 = arith.constant 0.83651632 : f32
    %4 = vector.broadcast %cst_3 : f32 to vector<8x15xf32>
    %5 = arith.mulf %4, %1 : vector<8x15xf32>
    %6 = arith.addf %3, %5 : vector<8x15xf32>
    %cst_4 = arith.constant -0.129409522 : f32
    %7 = vector.broadcast %cst_4 : f32 to vector<8x15xf32>
    %8 = arith.mulf %7, %0 : vector<8x15xf32>
    %cst_5 = arith.constant -0.482962906 : f32
    %9 = vector.broadcast %cst_5 : f32 to vector<8x15xf32>
    %10 = arith.mulf %9, %1 : vector<8x15xf32>
    %11 = arith.addf %8, %10 : vector<8x15xf32>
    %c0_6 = arith.constant 0 : index
    %c1 = arith.constant 1 : index
    %12 = vector.load %arg1[%c0_6, %c1] : memref<8x16xf32, #tpu.memory_space<vmem>>, vector<8x15xf32>
    %c0_7 = arith.constant 0 : index
    %c1_8 = arith.constant 1 : index
    %13 = vector.load %arg2[%c0_7, %c1_8] : memref<8x16xf32, #tpu.memory_space<vmem>>, vector<8x15xf32>
    %cst_9 = arith.constant 0.482962906 : f32
    %14 = vector.broadcast %cst_9 : f32 to vector<8x15xf32>
    %15 = arith.mulf %14, %12 : vector<8x15xf32>
    %cst_10 = arith.constant -0.129409522 : f32
    %16 = vector.broadcast %cst_10 : f32 to vector<8x15xf32>
    %17 = arith.mulf %16, %13 : vector<8x15xf32>
    %18 = arith.addf %15, %17 : vector<8x15xf32>
    %cst_11 = arith.constant 0.83651632 : f32
    %19 = vector.broadcast %cst_11 : f32 to vector<8x15xf32>
    %20 = arith.mulf %19, %12 : vector<8x15xf32>
    %cst_12 = arith.constant -0.224143863 : f32
    %21 = vector.broadcast %cst_12 : f32 to vector<8x15xf32>
    %22 = arith.mulf %21, %13 : vector<8x15xf32>
    %23 = arith.addf %20, %22 : vector<8x15xf32>
    %24 = arith.addf %6, %18 : vector<8x15xf32>
    %25 = arith.addf %11, %23 : vector<8x15xf32>
    %c0_13 = arith.constant 0 : index
    %c0_14 = arith.constant 0 : index
    %26 = vector.load %arg3[%c0_13, %c0_14] : memref<8x15xf32, #tpu.memory_space<vmem>>, vector<8x15xf32>
    tpu.vector_store %arg3[%c0_13, %c0_14], %24 {strides = array<i32>} : memref<8x15xf32, #tpu.memory_space<vmem>>, vector<8x15xf32>,
    %c0_15 = arith.constant 0 : index
    %c0_16 = arith.constant 0 : index
    %27 = vector.load %arg4[%c0_15, %c0_16] : memref<8x15xf32, #tpu.memory_space<vmem>>, vector<8x15xf32>
    tpu.vector_store %arg4[%c0_15, %c0_16], %25 {strides = array<i32>} : memref<8x15xf32, #tpu.memory_space<vmem>>, vector<8x15xf32>,
    return
  }
  func.func @transform_0(%arg0: i32) -> (i32, i32) {
    %c0_i32 = arith.constant 0 : i32
    %c0_i32_0 = arith.constant 0 : i32
    return %arg0, %c0_i32 : i32, i32
  }
  func.func @transform_1(%arg0: i32) -> (i32, i32) {
    %c0_i32 = arith.constant 0 : i32
    %c0_i32_0 = arith.constant 0 : i32
    return %arg0, %c0_i32 : i32, i32
  }
  func.func @transform_2(%arg0: i32) -> (i32, i32) {
    %c0_i32 = arith.constant 0 : i32
    %c0_i32_0 = arith.constant 0 : i32
    return %arg0, %c0_i32 : i32, i32
  }
  func.func @transform_3(%arg0: i32) -> (i32, i32) {
    %c0_i32 = arith.constant 0 : i32
    %c0_i32_0 = arith.constant 0 : i32
    return %arg0, %c0_i32 : i32, i32
  }
}

</mosaic_0001>

<llo_original>
// kernel: tpu_custom_call.1
$region0: #{tpu_custom_call.1}
  #allocation0 [shape = 'u32[]', space=smem, size = 0x4, offset = 0x4, fixed_abs, tag = 'smem constant byte address 0x4 - core index']
  #allocation1 [shape = 'u32[144,128]{1,0:T(1,128)}', space=vmem, size = 0x12000, scoped, tag = 'internal scratch']
  %s0 = inlined_call_operand.hbm [shape: f32[8,16], index: 0, kind: input, shape index: {}]
  %s1 = inlined_call_operand.hbm [shape: f32[8,16], index: 1, kind: input, shape index: {}]
  %s2 = inlined_call_operand.hbm [shape: f32[8,15], index: 2, kind: output, shape index: {0}]
  %s3 = inlined_call_operand.hbm [shape: f32[8,15], index: 3, kind: output, shape index: {1}]
  %4 = xla_tuple %s2, %s3
  %s5 = sld [smem:[#allocation0]]
  $region34: #{tpu_custom_call.1} parent=0
    _
  %s7 = ssub.s32 1, %s5
  %s8 = scalar_select 0, %s7, %s5
  $region1: #{tpu_custom_call.1} parent=0
    #allocation2 [shape = 'u8[4096]{0}', space=vmem, size = 0x1000, scoped, tag = 'input window, operand 0, single buffered']
    #allocation3 [shape = 's32[1]{0}', space=sflag, size = 0x4, scoped, tag = 'scoped memory for tpu_custom_call.1']
    #allocation4 [shape = 's32[1]{0}', space=sflag, size = 0x4, scoped, tag = 'scoped memory for tpu_custom_call.1']
    #allocation5 [shape = 'u8[4096]{0}', space=vmem, size = 0x1000, scoped, tag = 'input window, operand 1, single buffered']
    #allocation6 [shape = 's32[1]{0}', space=sflag, size = 0x4, scoped, tag = 'scoped memory for tpu_custom_call.1']
    #allocation7 [shape = 'u8[4096]{0}', space=vmem, size = 0x1000, scoped, tag = 'output window, operand 0, single buffered']
    #allocation8 [shape = 'u8[4096]{0}', space=vmem, size = 0x1000, scoped, tag = 'output window, operand 1, single buffered']
    #allocation9 [shape = 's32[1]{0}', space=sflag, size = 0x4, scoped, tag = 'scoped memory for tpu_custom_call.1']
    %9 = vsyncpa [#allocation3], 0
    %10 = vsyncpa [#allocation6], 0
    %11 = vsyncpa [#allocation4], 0
    %12 = vsyncpa [#allocation9], 0
    // Predicated region
    $region2: #{tpu_custom_call.1} parent=1 // pred_check
      _
    $region3: #{tpu_custom_call.1} parent=1 // pred_check_branch
      %14 = sbr.rel (0) target = $region5
    $region4: #{tpu_custom_call.1} parent=1 // pred_region
      %s16 = ssub.s32 128, 128
      %17 = vsyncadd [#allocation3], %s16
      %s19 = sshll.u32 [#allocation2], 4
      %s20 = int_to_ptr.vmem [resolvable:$true] %s19
      %22 = dma.hbm_to_vmem [thread:$0]  %s0, 128, %s20, [#allocation3]
    $region5: #{tpu_custom_call.1} parent=1 // pred_fallthru
      _
    // Predicated region
    $region6: #{tpu_custom_call.1} parent=1 // pred_check
      _
    $region7: #{tpu_custom_call.1} parent=1 // pred_check_branch
      %24 = sbr.rel (0) target = $region9
    $region8: #{tpu_custom_call.1} parent=1 // pred_region
      %s26 = ssub.s32 128, 128
      %27 = vsyncadd [#allocation6], %s26
      %s29 = sshll.u32 [#allocation5], 4
      %s30 = int_to_ptr.vmem [resolvable:$true] %s29
      %32 = dma.hbm_to_vmem [thread:$0]  %s1, 128, %s30, [#allocation6]
    $region9: #{tpu_custom_call.1} parent=1 // pred_fallthru
      _
    // Predicated region
    $region10: #{tpu_custom_call.1} parent=1 // pred_check
      _
    $region11: #{tpu_custom_call.1} parent=1 // pred_check_branch
      %34 = sbr.rel (0) target = $region13
    $region12: #{tpu_custom_call.1} parent=1 // pred_region
      %35 = dma.done [#allocation3], 128
    $region13: #{tpu_custom_call.1} parent=1 // pred_fallthru
      _
    // Predicated region
    $region14: #{tpu_custom_call.1} parent=1 // pred_check
      _
    $region15: #{tpu_custom_call.1} parent=1 // pred_check_branch
      %37 = sbr.rel (0) target = $region17
    $region16: #{tpu_custom_call.1} parent=1 // pred_region
      %38 = dma.done [#allocation6], 128
    $region17: #{tpu_custom_call.1} parent=1 // pred_fallthru
      _
    %v39 = vld [vmem:[#allocation2] sm:$0xff]
    %v40 = vld [vmem:[#allocation5] sm:$0xff]
    %v41 = vmul.f32 %v39, 0.22414386
    %v42 = vmul.f32 %v40, 0.8365163
    %v43 = vadd.f32 %v41, %v42
    %v44 = vmul.f32 %v39, -0.12940952
    %v45 = vmul.f32 %v40, -0.4829629
    %v46 = vadd.f32 %v44, %v45
    %v47 = vmul.f32 %v39, 0.4829629
    %v48 = vmul.f32 %v40, -0.12940952
    %v49 = vadd.f32 %v47, %v48
    %v50 = vmul.f32 %v39, 0.8365163
    %v51 = vmul.f32 %v40, -0.22414386
    %v52 = vadd.f32 %v50, %v51
    %54 = vrot.lane.b32.xlu0 %v49, 127
    %v55 = vpop.permute.xlu0 %54
    %v57 = vadd.f32 %v43, %v55
    %59 = vrot.lane.b32.xlu0 %v52, 127
    %v60 = vpop.permute.xlu0 %59
    %v62 = vadd.f32 %v46, %v60
    %vm63 = vcmask 121856
    %64 = vst.msk [vmem:[#allocation7] sm:$0xff] %vm63, %v57
    %65 = vst.msk [vmem:[#allocation8] sm:$0xff] %vm63, %v62
    // Predicated region
    $region18: #{tpu_custom_call.1} parent=1 // pred_check
      _
    $region19: #{tpu_custom_call.1} parent=1 // pred_check_branch
      %67 = sbr.rel (0) target = $region21
    $region20: #{tpu_custom_call.1} parent=1 // pred_region
      %s69 = ssub.s32 128, 128
      %70 = vsyncadd [#allocation4], %s69
      %s72 = sshll.u32 [#allocation7], 4
      %s73 = int_to_ptr.vmem [resolvable:$true] %s72
      %75 = dma.vmem_to_hbm [thread:$0]  %s73, 128, %s2, [#allocation4]
    $region21: #{tpu_custom_call.1} parent=1 // pred_fallthru
      _
    // Predicated region
    $region22: #{tpu_custom_call.1} parent=1 // pred_check
      _
    $region23: #{tpu_custom_call.1} parent=1 // pred_check_branch
      %77 = sbr.rel (0) target = $region25
    $region24: #{tpu_custom_call.1} parent=1 // pred_region
      %s79 = ssub.s32 128, 128
      %80 = vsyncadd [#allocation9], %s79
      %s82 = sshll.u32 [#allocation8], 4
      %s83 = int_to_ptr.vmem [resolvable:$true] %s82
      %85 = dma.vmem_to_hbm [thread:$0]  %s83, 128, %s3, [#allocation9]
    $region25: #{tpu_custom_call.1} parent=1 // pred_fallthru
      _
    // Predicated region
    $region26: #{tpu_custom_call.1} parent=1 // pred_check
      _
    $region27: #{tpu_custom_call.1} parent=1 // pred_check_branch
      %87 = sbr.rel (0) target = $region29
    $region28: #{tpu_custom_call.1} parent=1 // pred_region
      %88 = dma.done [#allocation4], 128
    $region29: #{tpu_custom_call.1} parent=1 // pred_fallthru
      _
    // Predicated region
    $region30: #{tpu_custom_call.1} parent=1 // pred_check
      _
    $region31: #{tpu_custom_call.1} parent=1 // pred_check_branch
      %90 = sbr.rel (0) target = $region33
    $region32: #{tpu_custom_call.1} parent=1 // pred_region
      %91 = dma.done [#allocation9], 128
    $region33: #{tpu_custom_call.1} parent=1 // pred_fallthru
      _
    %92 = vsyncpa [#allocation3], 1
    %93 = vsyncpa [#allocation6], 1
    %94 = vsyncpa [#allocation4], 1
    %95 = vsyncpa [#allocation9], 1

</llo_original>
